<compile_context>
chip_gen: v7x
topology: tpu7x:2x2x1
jax: 0.10.0
libtpu: 0.0.40
codegen_flags: <defaults>
</compile_context>

<pallas_src>
import functools

import jax
import jax.numpy as jnp
import numpy as np
from jax.experimental import pallas as pl
from jax.experimental.pallas import tpu as pltpu

_LN_EPS = 1e-5
_INV_SQRT2 = 0.7071067811865476
_NEG_BIG = -1e30


def _round_up(x, m):
    return ((x + m - 1) // m) * m


# ----------------------------------------------------------------------------
# Device capability probing (generation-dependent choices).
# ----------------------------------------------------------------------------
def _tpu_kind():
    try:
        d = jax.devices()[0]
        if d.platform != "tpu":
            return ""
        return d.device_kind.lower()
    except Exception:
        return ""


def _device_caps():
    kind = _tpu_kind()
    # bf16 VPU/EUP exist on v6e and v7x; v5e and earlier have none.
    bf16_vpu = any(t in kind for t in ("v6", "v7", "7x"))
    # v7x has two TensorCores per chip sharing a pallas_call.
    multi_tc = ("v7" in kind) or ("7x" in kind)
    return bf16_vpu, multi_tc


# ----------------------------------------------------------------------------
# GELU(approximate='none') via Abramowitz & Stegun 7.1.26 erf polynomial
# (max abs err ~1.5e-7 in exact arithmetic); lax.erf has no direct Mosaic
# lowering.  dtype-generic: runs in bf16 on v6e/v7x, f32 on v5e.  The divide is
# routed to the EUP (pl.reciprocal) in f32 and cast back, co-issuing with
# VPU/MXU work.
# ----------------------------------------------------------------------------
def _erf(x):
    a1, a2, a3, a4, a5 = (0.254829592, -0.284496736, 1.421413741,
                          -1.453152027, 1.061405429)
    p = 0.3275911
    s = jnp.where(x < 0.0, -1.0, 1.0).astype(x.dtype)
    ax = jnp.abs(x)
    t = pl.reciprocal((1.0 + p * ax).astype(jnp.float32),
                      approx=True).astype(x.dtype)
    poly = ((((a5 * t + a4) * t + a3) * t + a2) * t + a1) * t
    return s * (1.0 - poly * jnp.exp(-ax * ax))


def _gelu_exact(x):
    return 0.5 * x * (1.0 + _erf(x * _INV_SQRT2))


# ----------------------------------------------------------------------------
# Kernel: Linear -> LayerNorm -> GELU -> Linear -> per-row NLL
# ----------------------------------------------------------------------------
def _classifier_kernel(gelu_dtype, x_ref, w1_ref, b1_ref, g_ref, be_ref,
                       w2_ref, b2_ref, lbl_ref, logits_ref, nll_ref):
    # Linear(emb_size -> hidden): bf16 operands on the MXU, f32 accumulation.
    h = jnp.dot(x_ref[...], w1_ref[...],
                preferred_element_type=jnp.float32) + b1_ref[...]

    # LayerNorm(hidden, eps=1e-5, elementwise_affine=True) — one-pass stats in
    # f32: var = E[h^2] - mu^2 (clamped at 0; post-matmul activations have
    # moderate mean/variance so cancellation is benign in f32).
    inv_h = 1.0 / h.shape[-1]
    s1 = jnp.sum(h, axis=-1, keepdims=True)
    s2 = jnp.sum(h * h, axis=-1, keepdims=True)
    mu = s1 * inv_h
    var = jnp.maximum(s2 * inv_h - mu * mu, 0.0)
    hn = (h - mu) * jax.lax.rsqrt(var + _LN_EPS)
    hn = hn * g_ref[...] + be_ref[...]

    # GELU(approximate='none') — bf16 on v6e/v7x, f32 on v5e.
    ge = _gelu_exact(hn.astype(gelu_dtype))

    # Linear(hidden -> num_classes_padded): bf16 operands, f32 accumulation.
    # Padded class columns carry a -1e30 bias so they vanish under logsumexp.
    logits = jnp.dot(ge.astype(w2_ref.dtype), w2_ref[...],
                     preferred_element_type=jnp.float32) + b2_ref[...]
    logits_ref[...] = logits.astype(logits_ref.dtype)

    # Per-row cross-entropy term: logsumexp - logits[label].  No cross-step
    # state, so the batch grid axis stays 'parallel' (shards across v7x TCs).
    m = jnp.max(logits, axis=-1, keepdims=True)
    lse = m + jnp.log(jnp.sum(jnp.exp(logits - m), axis=-1, keepdims=True))
    cls = jax.lax.broadcasted_iota(jnp.int32, logits.shape, 1)
    picked = jnp.sum(jnp.where(cls == lbl_ref[...], logits, 0.0),
                     axis=-1, keepdims=True)
    nll_ref[...] = lse - picked


# ----------------------------------------------------------------------------
# One-time parameter preparation (outside the hot path): bf16 weights,
# lane-dense class padding, (1, H) layouts for the per-feature vectors.
# ----------------------------------------------------------------------------
def prepare_params(params):
    w1, b1, gamma, beta, w2, b2 = params
    E, H = w1.shape
    C = w2.shape[1]
    C_pad = _round_up(max(C, 128), 128)   # exactly 128 for small class counts
    f32, bf16 = jnp.float32, jnp.bfloat16
    return {
        "w1": w1.astype(bf16),
        "b1": jnp.asarray(b1, f32).reshape(1, H),
        "gamma": jnp.asarray(gamma, f32).reshape(1, H),
        "beta": jnp.asarray(beta, f32).reshape(1, H),
        "w2": jnp.pad(w2.astype(bf16), ((0, 0), (0, C_pad - C))),
        "b2": jnp.pad(jnp.asarray(b2, f32).reshape(1, C),
                      ((0, 0), (0, C_pad - C)), constant_values=_NEG_BIG),
        "num_classes": C,
    }


def _pick_block_b(B, multi_tc):
    if multi_tc and 32 <= B <= 512:
        # >= 2 grid steps so the 'parallel' batch axis shards across both TCs.
        return _round_up(-(-B // 2), 16)
    if B <= 256:
        return _round_up(max(B, 8), 16)
    return 256


def _resident_spec(shape):
    """Grid-invariant operand: constant index_map, single-buffered if possible."""
    idx = lambda i: (0, 0)
    if hasattr(pl, "Buffered"):
        try:
            return pl.BlockSpec(shape, idx, pipeline_mode=pl.Buffered(1))
        except TypeError:
            pass
    return pl.BlockSpec(shape, idx)


def _vmem_budget(block_b, E, H, C_pad):
    # Single-buffered residents + double-buffered per-step blocks + f32 temps,
    # with 50% headroom; 16 MiB floor.  Stays well under 64 MiB at production
    # sizes (E=768, H=2048, block_b=256 -> ~20 MiB).
    resident = E * H * 2 + 3 * H * 4 + H * C_pad * 2 + C_pad * 4
    per_step_in = block_b * (E * 2 + 4)          # x (bf16) + labels (i32)
    per_step_out = block_b * (C_pad * 4 + 4)     # logits (f32) + nll (f32)
    temps = 4 * block_b * H * 4                  # h / hn / ge / misc (f32)
    need = resident + 2 * (per_step_in + per_step_out) + temps
    return max(16 * 1024 * 1024, int(need * 1.5))


# ----------------------------------------------------------------------------
# Wrapper: classifier head + mean cross-entropy loss.
# ----------------------------------------------------------------------------
def vilt_atype_classifier_head(pooled, prepared, labels, *, block_b=None,
                               gelu_dtype=None):
    """Custom ViLT classifier head. Returns (logits (B, C), mean CE loss).

    `prepared` must come from prepare_params (bf16 / pre-padded weights)."""
    w1b, b1r = prepared["w1"], prepared["b1"]
    gr, ber = prepared["gamma"], prepared["beta"]
    w2b, b2p = prepared["w2"], prepared["b2"]
    C = prepared["num_classes"]

    B, E = pooled.shape
    H = w1b.shape[1]
    C_pad = w2b.shape[1]

    bf16_vpu, multi_tc = _device_caps()
    if gelu_dtype is None:
        gelu_dtype = jnp.bfloat16 if bf16_vpu else jnp.float32

    if block_b is None:
        block_b = _pick_block_b(B, multi_tc)
    block_b = _round_up(block_b, 16)
    B_pad = _round_up(B, block_b)

    f32, bf16 = jnp.float32, jnp.bfloat16

    # Activation-sized prep only (tiny next to the weight DMA): bf16 cast of the
    # pooled embedding and optional batch padding to a multiple of block_b.
    x = pooled.astype(bf16)
    lbl = labels.astype(jnp.int32).reshape(B, 1)
    if B_pad != B:
        x = jnp.pad(x, ((0, B_pad - B), (0, 0)))
        lbl = jnp.pad(lbl, ((0, B_pad - B), (0, 0)))

    kernel = functools.partial(_classifier_kernel, gelu_dtype)

    # Note: with constant index_maps + Buffered(1) the weight blocks are fetched
    # once and stay VMEM-resident across all batch-tile grid steps (B > 256).
    logits_pad, nll = pl.pallas_call(
        kernel,
        out_shape=(jax.ShapeDtypeStruct((B_pad, C_pad), f32),
                   jax.ShapeDtypeStruct((B_pad, 1), f32)),
        grid_spec=pltpu.PrefetchScalarGridSpec(
            num_scalar_prefetch=0,
            grid=(B_pad // block_b,),
            in_specs=[
                pl.BlockSpec((block_b, E), lambda i: (i, 0)),  # pooled CLS emb
                _resident_spec((E, H)),                        # W1 (resident)
                _resident_spec((1, H)),                        # b1
                _resident_spec((1, H)),                        # LN gamma
                _resident_spec((1, H)),                        # LN beta
                _resident_spec((H, C_pad)),                    # W2 (resident)
                _resident_spec((1, C_pad)),                    # b2 (pad = -1e30)
                pl.BlockSpec((block_b, 1), lambda i: (i, 0)),  # labels
            ],
            out_specs=[
                pl.BlockSpec((block_b, C_pad), lambda i: (i, 0)),  # logits
                pl.BlockSpec((block_b, 1), lambda i: (i, 0)),      # per-row NLL
            ],
        ),
        compiler_params=pltpu.CompilerParams(
            dimension_semantics=("parallel",),
            vmem_limit_bytes=_vmem_budget(block_b, E, H, C_pad)),
    )(x, w1b, b1r, gr, ber, w2b, b2p, lbl)

    logits = logits_pad[:B, :C]
    loss = jnp.sum(nll[:B, 0]) / B
    return logits, loss


# ----------------------------------------------------------------------------
# Params / reference
# ----------------------------------------------------------------------------
def init_params(key, emb_size, hidden, num_classes):
    k1, k2 = jax.random.split(key)
    w1 = jax.random.normal(k1, (emb_size, hidden), jnp.float32) * 0.02
    b1 = jnp.zeros((1, hidden), jnp.float32)
    gamma = jnp.ones((1, hidden), jnp.float32)
    beta = jnp.zeros((1, hidden), jnp.float32)
    w2 = jax.random.normal(k2, (hidden, num_classes), jnp.float32) * 0.02
    b2 = jnp.zeros((1, num_classes), jnp.float32)
    return w1, b1, gamma, beta, w2, b2


def _reference(pooled, params, labels, *, matmul_dtype=jnp.float32,
               gelu_dtype=jnp.float32):
    """Pure-JAX reference.  matmul_dtype/gelu_dtype = bfloat16 mirror the kernel
    numerics on the corresponding chips; all-float32 is the full-precision
    semantic reference."""
    w1, b1, gamma, beta, w2, b2 = params
    md = matmul_dtype
    h = jnp.dot(pooled.astype(md), w1.astype(md),
                preferred_element_type=jnp.float32) + b1
    mu = h.mean(-1, keepdims=True)
    var = ((h - mu) ** 2).mean(-1, keepdims=True)
    hn = (h - mu) * jax.lax.rsqrt(var + _LN_EPS) * gamma + beta
    hg = hn.astype(gelu_dtype)
    ge = 0.5 * hg * (1.0 + jax.scipy.special.erf(hg * _INV_SQRT2))
    logits = jnp.dot(ge.astype(md), w2.astype(md),
                     preferred_element_type=jnp.float32) + b2
    lse = jax.scipy.special.logsumexp(logits, axis=-1)
    picked = jnp.take_along_axis(logits, labels[:, None], axis=-1)[:, 0]
    loss = jnp.mean(lse - picked)
    return logits, loss


if __name__ == "__main__":
    # Small shapes consistent with the module (scaled-down emb_size / hidden).
    B, E, H, C = 16, 128, 256, 4   # batch, emb_size(768->), hidden(2048->), classes
    key = jax.random.PRNGKey(0)
    kp, kx, kl = jax.random.split(key, 3)
    params = init_params(kp, E, H, C)
    pooled = jax.random.normal(kx, (B, E), jnp.float32)  # stands in for ViLT pooler output
    labels = jax.random.randint(kl, (B,), 0, C)

    # One-time weight prep (bf16 cast + class-axis padding), outside hot path.
    prepared = jax.tree_util.tree_map(jax.block_until_ready,
                                      prepare_params(params))

    logits, loss = jax.block_until_ready(
        vilt_atype_classifier_head(pooled, prepared, labels))

    # Tight check against a reference mirroring the kernel numerics
    # (bf16 MXU operands, f32 accumulation; GELU dtype matches the chip).
    bf16_vpu, _ = _device_caps()
    k_gelu = jnp.bfloat16 if bf16_vpu else jnp.float32
    tight = 1.5e-2 if k_gelu == jnp.bfloat16 else 3e-3
    ref_logits, ref_loss = _reference(pooled, params, labels,
                                      matmul_dtype=jnp.bfloat16,
                                      gelu_dtype=k_gelu)
    np.testing.assert_allclose(np.asarray(logits), np.asarray(ref_logits),
                               rtol=tight, atol=tight)
    np.testing.assert_allclose(float(loss), float(ref_loss),
                               rtol=tight, atol=tight)

    # Loose sanity check against the all-f32 semantic reference
    # (expected bf16-vs-f32 numerics gap, not a bug).
    f32_logits, f32_loss = _reference(pooled, params, labels,
                                      matmul_dtype=jnp.float32,
                                      gelu_dtype=jnp.float32)
    np.testing.assert_allclose(np.asarray(logits), np.asarray(f32_logits),
                               rtol=5e-2, atol=5e-2)
    np.testing.assert_allclose(float(loss), float(f32_loss),
                               rtol=5e-2, atol=5e-2)

    print("KERNEL_OK")
</pallas_src>

<mosaic_0001>
module attributes {stable_mosaic.version = 11 : i64} {
  func.func @_classifier_kernel(%arg0: i32, %arg1: memref<16x128xbf16, #tpu.memory_space<vmem>>, %arg2: memref<128x256xbf16, #tpu.memory_space<vmem>>, %arg3: memref<1x256xf32, #tpu.memory_space<vmem>>, %arg4: memref<1x256xf32, #tpu.memory_space<vmem>>, %arg5: memref<1x256xf32, #tpu.memory_space<vmem>>, %arg6: memref<256x128xbf16, #tpu.memory_space<vmem>>, %arg7: memref<1x128xf32, #tpu.memory_space<vmem>>, %arg8: memref<16x1xi32, #tpu.memory_space<vmem>>, %arg9: memref<16x128xf32, #tpu.memory_space<vmem>>, %arg10: memref<16x1xf32, #tpu.memory_space<vmem>>) attributes {dimension_semantics = [#tpu.dimension_semantics<parallel>], iteration_bounds = array<i64: 1>, scalar_prefetch = 0 : i64, scratch_operands = 0 : i64, tpu.core_type = #tpu.core_type<tc>, window_params = [{transform_indices = @transform_0, window_bounds = array<i64: 16, 128>}, {pipeline_mode = #tpu.pipeline_mode<synchronous>, transform_indices = @transform_1, window_bounds = array<i64: 128, 256>}, {pipeline_mode = #tpu.pipeline_mode<synchronous>, transform_indices = @transform_2, window_bounds = array<i64: 1, 256>}, {pipeline_mode = #tpu.pipeline_mode<synchronous>, transform_indices = @transform_3, window_bounds = array<i64: 1, 256>}, {pipeline_mode = #tpu.pipeline_mode<synchronous>, transform_indices = @transform_4, window_bounds = array<i64: 1, 256>}, {pipeline_mode = #tpu.pipeline_mode<synchronous>, transform_indices = @transform_5, window_bounds = array<i64: 256, 128>}, {pipeline_mode = #tpu.pipeline_mode<synchronous>, transform_indices = @transform_6, window_bounds = array<i64: 1, 128>}, {transform_indices = @transform_7, window_bounds = array<i64: 16, 1>}, {transform_indices = @transform_8, window_bounds = array<i64: 16, 128>}, {transform_indices = @transform_9, window_bounds = array<i64: 16, 1>}]} {
    %c0 = arith.constant 0 : index
    %c0_0 = arith.constant 0 : index
    %0 = vector.load %arg1[%c0, %c0_0] : memref<16x128xbf16, #tpu.memory_space<vmem>>, vector<16x128xbf16>
    %c0_1 = arith.constant 0 : index
    %c0_2 = arith.constant 0 : index
    %1 = vector.load %arg2[%c0_1, %c0_2] : memref<128x256xbf16, #tpu.memory_space<vmem>>, vector<128x256xbf16>
    %cst = arith.constant dense<0.000000e+00> : vector<16x256xf32>
    %2 = tpu.matmul %0, %1, %cst {dimension_numbers = #tpu.dot_dimension_numbers<[1], [0], [0], [1], [0, 0, 1, 1], [], []>} : vector<16x128xbf16>, vector<128x256xbf16>, vector<16x256xf32> -> vector<16x256xf32>
    %c0_3 = arith.constant 0 : index
    %c0_4 = arith.constant 0 : index
    %3 = vector.load %arg3[%c0_3, %c0_4] : memref<1x256xf32, #tpu.memory_space<vmem>>, vector<1x256xf32>
    %4 = vector.broadcast %3 : vector<1x256xf32> to vector<16x256xf32>
    %5 = arith.addf %2, %4 : vector<16x256xf32>
    %cst_5 = arith.constant dense<0.000000e+00> : vector<16xf32>
    %6 = vector.multi_reduction <add>, %5, %cst_5 [1] : vector<16x256xf32> to vector<16xf32>
    %7 = vector.shape_cast %6 : vector<16xf32> to vector<16x1xf32>
    %8 = arith.mulf %5, %5 : vector<16x256xf32>
    %cst_6 = arith.constant dense<0.000000e+00> : vector<16xf32>
    %9 = vector.multi_reduction <add>, %8, %cst_6 [1] : vector<16x256xf32> to vector<16xf32>
    %10 = vector.shape_cast %9 : vector<16xf32> to vector<16x1xf32>
    %cst_7 = arith.constant 3.906250e-03 : f32
    %11 = vector.broadcast %cst_7 : f32 to vector<16x1xf32>
    %12 = arith.mulf %7, %11 : vector<16x1xf32>
    %cst_8 = arith.constant 3.906250e-03 : f32
    %13 = vector.broadcast %cst_8 : f32 to vector<16x1xf32>
    %14 = arith.mulf %10, %13 : vector<16x1xf32>
    %15 = arith.mulf %12, %12 : vector<16x1xf32>
    %16 = arith.subf %14, %15 : vector<16x1xf32>
    %cst_9 = arith.constant 0.000000e+00 : f32
    %17 = vector.broadcast %cst_9 : f32 to vector<16x1xf32>
    %18 = arith.maximumf %16, %17 : vector<16x1xf32>
    %19 = vector.broadcast %12 : vector<16x1xf32> to vector<16x256xf32>
    %20 = arith.subf %5, %19 : vector<16x256xf32>
    %cst_10 = arith.constant 9.99999974E-6 : f32
    %21 = vector.broadcast %cst_10 : f32 to vector<16x1xf32>
    %22 = arith.addf %18, %21 : vector<16x1xf32>
    %23 = math.rsqrt %22 : vector<16x1xf32>
    %24 = vector.broadcast %23 : vector<16x1xf32> to vector<16x256xf32>
    %25 = arith.mulf %20, %24 : vector<16x256xf32>
    %c0_11 = arith.constant 0 : index
    %c0_12 = arith.constant 0 : index
    %26 = vector.load %arg4[%c0_11, %c0_12] : memref<1x256xf32, #tpu.memory_space<vmem>>, vector<1x256xf32>
    %27 = vector.broadcast %26 : vector<1x256xf32> to vector<16x256xf32>
    %28 = arith.mulf %25, %27 : vector<16x256xf32>
    %c0_13 = arith.constant 0 : index
    %c0_14 = arith.constant 0 : index
    %29 = vector.load %arg5[%c0_13, %c0_14] : memref<1x256xf32, #tpu.memory_space<vmem>>, vector<1x256xf32>
    %30 = vector.broadcast %29 : vector<1x256xf32> to vector<16x256xf32>
    %31 = arith.addf %28, %30 : vector<16x256xf32>
    %cst_15 = arith.constant 5.000000e-01 : f32
    %32 = vector.broadcast %cst_15 : f32 to vector<16x256xf32>
    %33 = arith.mulf %32, %31 : vector<16x256xf32>
    %cst_16 = arith.constant 0.707106769 : f32
    %34 = vector.broadcast %cst_16 : f32 to vector<16x256xf32>
    %35 = arith.mulf %31, %34 : vector<16x256xf32>
    %cst_17 = arith.constant 0.000000e+00 : f32
    %36 = vector.broadcast %cst_17 : f32 to vector<16x256xf32>
    %37 = arith.cmpf olt, %35, %36 : vector<16x256xf32>
    %cst_18 = arith.constant -1.000000e+00 : f32
    %cst_19 = arith.constant 1.000000e+00 : f32
    %38 = vector.broadcast %cst_18 : f32 to vector<16x256xf32>
    %39 = vector.broadcast %cst_19 : f32 to vector<16x256xf32>
    %40 = arith.select %37, %38, %39 : vector<16x256xi1>, vector<16x256xf32>
    %41 = math.absf %35 : vector<16x256xf32>
    %cst_20 = arith.constant 0.327591091 : f32
    %42 = vector.broadcast %cst_20 : f32 to vector<16x256xf32>
    %43 = arith.mulf %42, %41 : vector<16x256xf32>
    %cst_21 = arith.constant 1.000000e+00 : f32
    %44 = vector.broadcast %cst_21 : f32 to vector<16x256xf32>
    %45 = arith.addf %44, %43 : vector<16x256xf32>
    %46 = tpu.reciprocal %45 {approx = true} : vector<16x256xf32> -> vector<16x256xf32>
    %cst_22 = arith.constant 1.06140542 : f32
    %47 = vector.broadcast %cst_22 : f32 to vector<16x256xf32>
    %48 = arith.mulf %47, %46 : vector<16x256xf32>
    %cst_23 = arith.constant -1.45315206 : f32
    %49 = vector.broadcast %cst_23 : f32 to vector<16x256xf32>
    %50 = arith.addf %48, %49 : vector<16x256xf32>
    %51 = arith.mulf %50, %46 : vector<16x256xf32>
    %cst_24 = arith.constant 1.42141378 : f32
    %52 = vector.broadcast %cst_24 : f32 to vector<16x256xf32>
    %53 = arith.addf %51, %52 : vector<16x256xf32>
    %54 = arith.mulf %53, %46 : vector<16x256xf32>
    %cst_25 = arith.constant -0.284496725 : f32
    %55 = vector.broadcast %cst_25 : f32 to vector<16x256xf32>
    %56 = arith.addf %54, %55 : vector<16x256xf32>
    %57 = arith.mulf %56, %46 : vector<16x256xf32>
    %cst_26 = arith.constant 0.254829586 : f32
    %58 = vector.broadcast %cst_26 : f32 to vector<16x256xf32>
    %59 = arith.addf %57, %58 : vector<16x256xf32>
    %60 = arith.mulf %59, %46 : vector<16x256xf32>
    %cst_27 = arith.constant 0.000000e+00 : f32
    %61 = vector.broadcast %cst_27 : f32 to vector<16x256xf32>
    %62 = arith.subf %61, %41 : vector<16x256xf32>
    %63 = arith.mulf %62, %41 : vector<16x256xf32>
    %64 = math.exp %63 : vector<16x256xf32>
    %65 = arith.mulf %60, %64 : vector<16x256xf32>
    %cst_28 = arith.constant 1.000000e+00 : f32
    %66 = vector.broadcast %cst_28 : f32 to vector<16x256xf32>
    %67 = arith.subf %66, %65 : vector<16x256xf32>
    %68 = arith.mulf %40, %67 : vector<16x256xf32>
    %cst_29 = arith.constant 1.000000e+00 : f32
    %69 = vector.broadcast %cst_29 : f32 to vector<16x256xf32>
    %70 = arith.addf %69, %68 : vector<16x256xf32>
    %71 = arith.mulf %33, %70 : vector<16x256xf32>
    %72 = arith.truncf %71 : vector<16x256xf32> to vector<16x256xbf16>
    %c0_30 = arith.constant 0 : index
    %c0_31 = arith.constant 0 : index
    %73 = vector.load %arg6[%c0_30, %c0_31] : memref<256x128xbf16, #tpu.memory_space<vmem>>, vector<256x128xbf16>
    %cst_32 = arith.constant dense<0.000000e+00> : vector<16x128xf32>
    %74 = tpu.matmul %72, %73, %cst_32 {dimension_numbers = #tpu.dot_dimension_numbers<[1], [0], [0], [1], [0, 0, 1, 1], [], []>} : vector<16x256xbf16>, vector<256x128xbf16>, vector<16x128xf32> -> vector<16x128xf32>
    %c0_33 = arith.constant 0 : index
    %c0_34 = arith.constant 0 : index
    %75 = vector.load %arg7[%c0_33, %c0_34] : memref<1x128xf32, #tpu.memory_space<vmem>>, vector<1x128xf32>
    %76 = vector.broadcast %75 : vector<1x128xf32> to vector<16x128xf32>
    %77 = arith.addf %74, %76 : vector<16x128xf32>
    %c0_35 = arith.constant 0 : index
    %c0_36 = arith.constant 0 : index
    %78 = vector.load %arg9[%c0_35, %c0_36] : memref<16x128xf32, #tpu.memory_space<vmem>>, vector<16x128xf32>
    tpu.vector_store %arg9[%c0_35, %c0_36], %77 {strides = array<i32>} : memref<16x128xf32, #tpu.memory_space<vmem>>, vector<16x128xf32>,
    %cst_37 = arith.constant dense<0xFF800000> : vector<16xf32>
    %79 = vector.multi_reduction <maximumf>, %77, %cst_37 [1] : vector<16x128xf32> to vector<16xf32>
    %80 = vector.shape_cast %79 : vector<16xf32> to vector<16x1xf32>
    %81 = vector.broadcast %80 : vector<16x1xf32> to vector<16x128xf32>
    %82 = arith.subf %77, %81 : vector<16x128xf32>
    %83 = math.exp %82 : vector<16x128xf32>
    %cst_38 = arith.constant dense<0.000000e+00> : vector<16xf32>
    %84 = vector.multi_reduction <add>, %83, %cst_38 [1] : vector<16x128xf32> to vector<16xf32>
    %85 = vector.shape_cast %84 : vector<16xf32> to vector<16x1xf32>
    %86 = math.log %85 : vector<16x1xf32>
    %87 = arith.addf %80, %86 : vector<16x1xf32>
    %88 = tpu.iota {dimensions = array<i32: 1>} : vector<16x128xi32>
    %c0_39 = arith.constant 0 : index
    %c0_40 = arith.constant 0 : index
    %89 = vector.load %arg8[%c0_39, %c0_40] : memref<16x1xi32, #tpu.memory_space<vmem>>, vector<16x1xi32>
    %90 = vector.broadcast %89 : vector<16x1xi32> to vector<16x128xi32>
    %91 = arith.cmpi eq, %88, %90 : vector<16x128xi32>
    %cst_41 = arith.constant 0.000000e+00 : f32
    %92 = vector.broadcast %cst_41 : f32 to vector<16x128xf32>
    %93 = arith.select %91, %77, %92 : vector<16x128xi1>, vector<16x128xf32>
    %cst_42 = arith.constant dense<0.000000e+00> : vector<16xf32>
    %94 = vector.multi_reduction <add>, %93, %cst_42 [1] : vector<16x128xf32> to vector<16xf32>
    %95 = vector.shape_cast %94 : vector<16xf32> to vector<16x1xf32>
    %96 = arith.subf %87, %95 : vector<16x1xf32>
    %c0_43 = arith.constant 0 : index
    %c0_44 = arith.constant 0 : index
    %97 = vector.load %arg10[%c0_43, %c0_44] : memref<16x1xf32, #tpu.memory_space<vmem>>, vector<16x1xf32>
    tpu.vector_store %arg10[%c0_43, %c0_44], %96 {strides = array<i32>} : memref<16x1xf32, #tpu.memory_space<vmem>>, vector<16x1xf32>,
    return
  }
  func.func @transform_0(%arg0: i32) -> (i32, i32) {
    %c0_i32 = arith.constant 0 : i32
    %c0_i32_0 = arith.constant 0 : i32
    return %arg0, %c0_i32 : i32, i32
  }
  func.func @transform_1(%arg0: i32) -> (i32, i32) {
    %c0_i32 = arith.constant 0 : i32
    %c0_i32_0 = arith.constant 0 : i32
    %c0_i32_1 = arith.constant 0 : i32
    return %c0_i32, %c0_i32_0 : i32, i32
  }
  func.func @transform_2(%arg0: i32) -> (i32, i32) {
    %c0_i32 = arith.constant 0 : i32
    %c0_i32_0 = arith.constant 0 : i32
    %c0_i32_1 = arith.constant 0 : i32
    return %c0_i32, %c0_i32_0 : i32, i32
  }
  func.func @transform_3(%arg0: i32) -> (i32, i32) {
    %c0_i32 = arith.constant 0 : i32
    %c0_i32_0 = arith.constant 0 : i32
    %c0_i32_1 = arith.constant 0 : i32
    return %c0_i32, %c0_i32_0 : i32, i32
  }
  func.func @transform_4(%arg0: i32) -> (i32, i32) {
    %c0_i32 = arith.constant 0 : i32
    %c0_i32_0 = arith.constant 0 : i32
    %c0_i32_1 = arith.constant 0 : i32
    return %c0_i32, %c0_i32_0 : i32, i32
  }
  func.func @transform_5(%arg0: i32) -> (i32, i32) {
    %c0_i32 = arith.constant 0 : i32
    %c0_i32_0 = arith.constant 0 : i32
    %c0_i32_1 = arith.constant 0 : i32
    return %c0_i32, %c0_i32_0 : i32, i32
  }
  func.func @transform_6(%arg0: i32) -> (i32, i32) {
    %c0_i32 = arith.constant 0 : i32
    %c0_i32_0 = arith.constant 0 : i32
    %c0_i32_1 = arith.constant 0 : i32
    return %c0_i32, %c0_i32_0 : i32, i32
  }
  func.func @transform_7(%arg0: i32) -> (i32, i32) {
    %c0_i32 = arith.constant 0 : i32
    %c0_i32_0 = arith.constant 0 : i32
    return %arg0, %c0_i32 : i32, i32
  }
  func.func @transform_8(%arg0: i32) -> (i32, i32) {
    %c0_i32 = arith.constant 0 : i32
    %c0_i32_0 = arith.constant 0 : i32
    return %arg0, %c0_i32 : i32, i32
  }
  func.func @transform_9(%arg0: i32) -> (i32, i32) {
    %c0_i32 = arith.constant 0 : i32
    %c0_i32_0 = arith.constant 0 : i32
    return %arg0, %c0_i32 : i32, i32
  }
}

</mosaic_0001>

<llo_original>
// kernel: tpu_custom_call.1
$region0: #{tpu_custom_call.1}
  #allocation0 [shape = 'u32[]', space=smem, size = 0x4, offset = 0x4, fixed_abs, tag = 'smem constant byte address 0x4 - core index']
  #allocation1 [shape = 'u32[144,128]{1,0:T(1,128)}', space=vmem, size = 0x12000, scoped, tag = 'internal scratch']
  %s0 = inlined_call_operand.vmem [shape: bf16[16,128], index: 0, kind: input, shape index: {}]
  %s1 = inlined_call_operand.hbm [shape: bf16[128,256], index: 1, kind: input, shape index: {}]
  %s2 = inlined_call_operand.vmem [shape: f32[1,256], index: 2, kind: input, shape index: {}]
  %s3 = inlined_call_operand.vmem [shape: f32[1,256], index: 3, kind: input, shape index: {}]
  %s4 = inlined_call_operand.vmem [shape: f32[1,256], index: 4, kind: input, shape index: {}]
  %s5 = inlined_call_operand.hbm [shape: bf16[256,128], index: 5, kind: input, shape index: {}]
  %s6 = inlined_call_operand.vmem [shape: f32[1,128], index: 6, kind: input, shape index: {}]
  %s7 = inlined_call_operand.vmem [shape: s32[16,1], index: 7, kind: input, shape index: {}]
  %s8 = inlined_call_operand.hbm [shape: f32[16,128], index: 8, kind: output, shape index: {0}]
  %s9 = inlined_call_operand.vmem [shape: f32[16,1], index: 9, kind: output, shape index: {1}]
  %10 = xla_tuple %s8, %s9
  %s11 = sld [smem:[#allocation0]]
  $region58: #{tpu_custom_call.1} parent=0
    _
  %s13 = ssub.s32 1, %s11
  %s14 = scalar_select 0, %s13, %s11
  $region1: #{tpu_custom_call.1} parent=0
    #allocation2 [shape = 'u8[65536]{0}', space=vmem, size = 0x10000, scoped, tag = 'input window, operand 1, single buffered']
    #allocation3 [shape = 's32[1]{0}', space=sflag, size = 0x4, scoped, tag = 'scoped memory for tpu_custom_call.1']
    #allocation4 [shape = 's32[1]{0}', space=sflag, size = 0x4, scoped, tag = 'scoped memory for tpu_custom_call.1']
    #allocation5 [shape = 'u8[65536]{0}', space=vmem, size = 0x10000, scoped, tag = 'input window, operand 5, single buffered']
    #allocation6 [shape = 's32[1]{0}', space=sflag, size = 0x4, scoped, tag = 'scoped memory for tpu_custom_call.1']
    #allocation7 [shape = 'u8[8192]{0}', space=vmem, size = 0x2000, scoped, tag = 'output window, operand 0, single buffered']
    %15 = vsyncpa [#allocation3], 0
    %16 = vsyncpa [#allocation6], 0
    %17 = vsyncpa [#allocation4], 0
    // Predicated region
    $region2: #{tpu_custom_call.1} parent=1 // pred_check
      _
    $region3: #{tpu_custom_call.1} parent=1 // pred_check_branch
      %19 = sbr.rel (0) target = $region5
    $region4: #{tpu_custom_call.1} parent=1 // pred_region
      _
    $region5: #{tpu_custom_call.1} parent=1 // pred_fallthru
      _
    // Predicated region
    $region6: #{tpu_custom_call.1} parent=1 // pred_check
      _
    $region7: #{tpu_custom_call.1} parent=1 // pred_check_branch
      %21 = sbr.rel (0) target = $region9
    $region8: #{tpu_custom_call.1} parent=1 // pred_region
      %s23 = ssub.s32 2048, 2048
      %24 = vsyncadd [#allocation3], %s23
      %s25 = sshll.u32 [#allocation2], 4
      %s26 = int_to_ptr.vmem [resolvable:$true] %s25
      %31 = dma.hbm_to_vmem [thread:$0]  %s1, 2048, %s26, [#allocation3], 128, 128, 8
    $region9: #{tpu_custom_call.1} parent=1 // pred_fallthru
      _
    // Predicated region
    $region10: #{tpu_custom_call.1} parent=1 // pred_check
      _
    $region11: #{tpu_custom_call.1} parent=1 // pred_check_branch
      %33 = sbr.rel (0) target = $region13
    $region12: #{tpu_custom_call.1} parent=1 // pred_region
      _
    $region13: #{tpu_custom_call.1} parent=1 // pred_fallthru
      _
    // Predicated region
    $region14: #{tpu_custom_call.1} parent=1 // pred_check
      _
    $region15: #{tpu_custom_call.1} parent=1 // pred_check_branch
      %35 = sbr.rel (0) target = $region17
    $region16: #{tpu_custom_call.1} parent=1 // pred_region
      _
    $region17: #{tpu_custom_call.1} parent=1 // pred_fallthru
      _
    // Predicated region
    $region18: #{tpu_custom_call.1} parent=1 // pred_check
      _
    $region19: #{tpu_custom_call.1} parent=1 // pred_check_branch
      %37 = sbr.rel (0) target = $region21
    $region20: #{tpu_custom_call.1} parent=1 // pred_region
      _
    $region21: #{tpu_custom_call.1} parent=1 // pred_fallthru
      _
    // Predicated region
    $region22: #{tpu_custom_call.1} parent=1 // pred_check
      _
    $region23: #{tpu_custom_call.1} parent=1 // pred_check_branch
      %39 = sbr.rel (0) target = $region25
    $region24: #{tpu_custom_call.1} parent=1 // pred_region
      %s41 = ssub.s32 2048, 2048
      %42 = vsyncadd [#allocation6], %s41
      %s43 = sshll.u32 [#allocation5], 4
      %s44 = int_to_ptr.vmem [resolvable:$true] %s43
      %49 = dma.hbm_to_vmem [thread:$0]  %s5, 2048, %s44, [#allocation6], 64, 64, 4
    $region25: #{tpu_custom_call.1} parent=1 // pred_fallthru
      _
    // Predicated region
    $region26: #{tpu_custom_call.1} parent=1 // pred_check
      _
    $region27: #{tpu_custom_call.1} parent=1 // pred_check_branch
      %51 = sbr.rel (0) target = $region29
    $region28: #{tpu_custom_call.1} parent=1 // pred_region
      _
    $region29: #{tpu_custom_call.1} parent=1 // pred_fallthru
      _
    // Predicated region
    $region30: #{tpu_custom_call.1} parent=1 // pred_check
      _
    $region31: #{tpu_custom_call.1} parent=1 // pred_check_branch
      %53 = sbr.rel (0) target = $region33
    $region32: #{tpu_custom_call.1} parent=1 // pred_region
      _
    $region33: #{tpu_custom_call.1} parent=1 // pred_fallthru
      _
    // Predicated region
    $region34: #{tpu_custom_call.1} parent=1 // pred_check
      _
    $region35: #{tpu_custom_call.1} parent=1 // pred_check_branch
      %55 = sbr.rel (0) target = $region37
    $region36: #{tpu_custom_call.1} parent=1 // pred_region
      %56 = dma.done [#allocation3], 2048
    $region37: #{tpu_custom_call.1} parent=1 // pred_fallthru
      _
    // Predicated region
    $region38: #{tpu_custom_call.1} parent=1 // pred_check
      _
    $region39: #{tpu_custom_call.1} parent=1 // pred_check_branch
      %58 = sbr.rel (0) target = $region41
    $region40: #{tpu_custom_call.1} parent=1 // pred_region
      %59 = dma.done [#allocation6], 2048
    $region41: #{tpu_custom_call.1} parent=1 // pred_fallthru
      _
    %v61 = vld [vmem:[%s0] sm:$0xf]
    %v62 = vld [vmem:[%s0 + $0x4] sm:$0xf]
    %v63 = vld [vmem:[#allocation2] sm:$0xff]
    %v64 = vld [vmem:[#allocation2 + $0x8] sm:$0xff]
    %v65 = vld [vmem:[#allocation2 + $0x10] sm:$0xff]
    %v66 = vld [vmem:[#allocation2 + $0x18] sm:$0xff]
    %v67 = vld [vmem:[#allocation2 + $0x20] sm:$0xff]
    %v68 = vld [vmem:[#allocation2 + $0x28] sm:$0xff]
    %v69 = vld [vmem:[#allocation2 + $0x30] sm:$0xff]
    %v70 = vld [vmem:[#allocation2 + $0x38] sm:$0xff]
    %v71 = vld [vmem:[#allocation2 + $0x40] sm:$0xff]
    %v72 = vld [vmem:[#allocation2 + $0x48] sm:$0xff]
    %v73 = vld [vmem:[#allocation2 + $0x50] sm:$0xff]
    %v74 = vld [vmem:[#allocation2 + $0x58] sm:$0xff]
    %v75 = vld [vmem:[#allocation2 + $0x60] sm:$0xff]
    %v76 = vld [vmem:[#allocation2 + $0x68] sm:$0xff]
    %v77 = vld [vmem:[#allocation2 + $0x70] sm:$0xff]
    %v78 = vld [vmem:[#allocation2 + $0x78] sm:$0xff]
    %v79 = vld [vmem:[%s2] sm:$0x3]
    %v81 = vlaneseq
    %v82 = vshrl.u32 %v81, 7
    %v83 = vsub.s32 0, %v82
    %v84 = vrot.slane %v79, %v83
    %v85 = vlaneseq
    %v86 = vshrl.u32 %v85, 7
    %v87 = vsub.s32 1, %v86
    %v88 = vrot.slane %v79, %v87
    %v93 = vunpack.c.l.b16 %v61
    %v94 = vunpack.c.l.b16 %v62
    %v95 = vpack.c.b16 %v94, %v93
    %v113 = vunpack.c.l.b16 %v63
    %v114 = vunpack.c.h.b16 %v63
    %v115 = vunpack.c.l.b16 %v64
    %v116 = vunpack.c.h.b16 %v64
    %v117 = vunpack.c.l.b16 %v65
    %v118 = vunpack.c.h.b16 %v65
    %v119 = vunpack.c.l.b16 %v66
    %v120 = vunpack.c.h.b16 %v66
    %v121 = vunpack.c.l.b16 %v67
    %v122 = vunpack.c.h.b16 %v67
    %v123 = vunpack.c.l.b16 %v68
    %v124 = vunpack.c.h.b16 %v68
    %v125 = vunpack.c.l.b16 %v69
    %v126 = vunpack.c.h.b16 %v69
    %v127 = vunpack.c.l.b16 %v70
    %v128 = vunpack.c.h.b16 %v70
    %v129 = vunpack.c.l.b16 %v71
    %v130 = vunpack.c.h.b16 %v71
    %v131 = vunpack.c.l.b16 %v72
    %v132 = vunpack.c.h.b16 %v72
    %v133 = vunpack.c.l.b16 %v73
    %v134 = vunpack.c.h.b16 %v73
    %v135 = vunpack.c.l.b16 %v74
    %v136 = vunpack.c.h.b16 %v74
    %v137 = vunpack.c.l.b16 %v75
    %v138 = vunpack.c.h.b16 %v75
    %v139 = vunpack.c.l.b16 %v76
    %v140 = vunpack.c.h.b16 %v76
    %v141 = vunpack.c.l.b16 %v77
    %v142 = vunpack.c.h.b16 %v77
    %v143 = vunpack.c.l.b16 %v78
    %v144 = vunpack.c.h.b16 %v78
    %v145 = vpack.c.b16 %v115, %v113
    %v146 = vpack.c.b16 %v116, %v114
    %v147 = vpack.c.b16 %v119, %v117
    %v148 = vpack.c.b16 %v120, %v118
    %v149 = vpack.c.b16 %v123, %v121
    %v150 = vpack.c.b16 %v124, %v122
    %v151 = vpack.c.b16 %v127, %v125
    %v152 = vpack.c.b16 %v128, %v126
    %v153 = vpack.c.b16 %v131, %v129
    %v154 = vpack.c.b16 %v132, %v130
    %v155 = vpack.c.b16 %v135, %v133
    %v156 = vpack.c.b16 %v136, %v134
    %v157 = vpack.c.b16 %v139, %v137
    %v158 = vpack.c.b16 %v140, %v138
    %v159 = vpack.c.b16 %v143, %v141
    %v160 = vpack.c.b16 %v144, %v142
    %177 = vmatprep.subr.bf16.mxu0 %v146
    %178 = vmatpush1.bf16.msra.mxu0 %v145
    %179 = vmatprep.subr.bf16.mxu0 %v148
    %180 = vmatpush1.bf16.msra.mxu0 %v147
    %181 = vmatprep.subr.bf16.mxu0 %v150
    %182 = vmatpush1.bf16.msra.mxu0 %v149
    %183 = vmatprep.subr.bf16.mxu0 %v152
    %184 = vmatpush1.bf16.msra.mxu0 %v151
    %185 = vmatprep.subr.bf16.mxu0 %v154
    %186 = vmatpush1.bf16.msra.mxu0 %v153
    %187 = vmatprep.subr.bf16.mxu0 %v156
    %188 = vmatpush1.bf16.msra.mxu0 %v155
    %189 = vmatprep.subr.bf16.mxu0 %v158
    %190 = vmatpush1.bf16.msra.mxu0 %v157
    %191 = vmatprep.subr.bf16.mxu0 %v160
    %192 = vmatpush1.bf16.msra.mxu0 %v159
    %193 = vmatprep.subr.bf16.mxu0 0
    %194 = vmatpush1.bf16.msra.mxu0 0
    %195 = vmatprep.subr.bf16.mxu0 0
    %196 = vmatpush1.bf16.msra.mxu0 0
    %197 = vmatprep.subr.bf16.mxu0 0
    %198 = vmatpush1.bf16.msra.mxu0 0
    %199 = vmatprep.subr.bf16.mxu0 0
    %200 = vmatpush1.bf16.msra.mxu0 0
    %201 = vmatprep.subr.bf16.mxu0 0
    %202 = vmatpush1.bf16.msra.mxu0 0
    %203 = vmatprep.subr.bf16.mxu0 0
    %204 = vmatpush1.bf16.msra.mxu0 0
    %205 = vmatprep.subr.bf16.mxu0 0
    %206 = vmatpush1.bf16.msra.mxu0 0
    %207 = vmatprep.subr.bf16.mxu0 0
    %208 = vmatpush1.bf16.msra.mxu0 0
    %209 = vmatprep.mubr.bf16.mxu0 0
    %210 = vmatmul.mubr.bf16.gmra.mrb[0].mxu0 %v95
    %v211 = vpop.f32.mrb[0].mxu0
    %v212 = vadd.f32 %v84, %v211
    %v213 = vpop.f32.mrb[0].mxu0
    %v214 = vadd.f32 %v88, %v213
    %v215 = vpop.f32.mrb[0].mxu0
    %v216 = vadd.f32 %v84, %v215
    %v217 = vpop.f32.mrb[0].mxu0
    %v218 = vadd.f32 %v88, %v217
    %219 = vdwg.mxu0
    %v220 = vadd.f32 %v212, %v214
    %221 = vadd.xlane.f32.xlu0 %v220
    %v222 = vpop.xlane.xlu0 %221
    %v223 = vadd.f32 %v216, %v218
    %224 = vadd.xlane.f32.xlu0 %v223
    %v225 = vpop.xlane.xlu0 %224
    %v226 = vmul.f32 %v212, %v212
    %v227 = vmul.f32 %v214, %v214
    %v228 = vmul.f32 %v216, %v216
    %v229 = vmul.f32 %v218, %v218
    %v230 = vadd.f32 %v226, %v227
    %231 = vadd.xlane.f32.xlu0 %v230
    %v232 = vpop.xlane.xlu0 %231
    %v233 = vadd.f32 %v228, %v229
    %234 = vadd.xlane.f32.xlu0 %v233
    %v235 = vpop.xlane.xlu0 %234
    %v236 = vmul.f32 %v222, 0.00390625
    %v237 = vmul.f32 %v225, 0.00390625
    %v238 = vmul.f32 %v232, 0.00390625
    %v239 = vmul.f32 %v235, 0.00390625
    %v240 = vmul.f32 %v236, %v236
    %v241 = vmul.f32 %v237, %v237
    %v242 = vsub.f32 %v238, %v240
    %v243 = vsub.f32 %v239, %v241
    %v244 = vmax.f32 %v242, 0.0
    %v245 = vmax.f32 %v243, 0.0
    %v246 = vsub.f32 %v212, %v236
    %v247 = vsub.f32 %v214, %v236
    %v248 = vsub.f32 %v216, %v237
    %v249 = vsub.f32 %v218, %v237
    %v250 = vadd.f32 %v244, 1e-05
    %v251 = vadd.f32 %v245, 1e-05
    %v252 = vrsqrt.pop %v250
    %v253 = vrsqrt.pop %v251
    %v254 = vmul.f32 %v246, %v252
    %v255 = vmul.f32 %v247, %v252
    %v256 = vmul.f32 %v248, %v253
    %v257 = vmul.f32 %v249, %v253
    %v258 = vld [vmem:[%s3] sm:$0x3]
    %v260 = vlaneseq
    %v261 = vshrl.u32 %v260, 7
    %v262 = vsub.s32 0, %v261
    %v263 = vrot.slane %v258, %v262
    %v264 = vlaneseq
    %v265 = vshrl.u32 %v264, 7
    %v266 = vsub.s32 1, %v265
    %v267 = vrot.slane %v258, %v266
    %v270 = vmul.f32 %v254, %v263
    %v271 = vmul.f32 %v255, %v267
    %v272 = vmul.f32 %v256, %v263
    %v273 = vmul.f32 %v257, %v267
    %v274 = vld [vmem:[%s4] sm:$0x3]
    %v276 = vlaneseq
    %v277 = vshrl.u32 %v276, 7
    %v278 = vsub.s32 0, %v277
    %v279 = vrot.slane %v274, %v278
    %v280 = vlaneseq
    %v281 = vshrl.u32 %v280, 7
    %v282 = vsub.s32 1, %v281
    %v283 = vrot.slane %v274, %v282
    %v286 = vadd.f32 %v270, %v279
    %v287 = vadd.f32 %v271, %v283
    %v288 = vadd.f32 %v272, %v279
    %v289 = vadd.f32 %v273, %v283
    %v290 = vmul.f32 %v286, 0.5
    %v291 = vmul.f32 %v287, 0.5
    %v292 = vmul.f32 %v288, 0.5
    %v293 = vmul.f32 %v289, 0.5
    %v294 = vmul.f32 %v286, 0.70710677
    %v295 = vmul.f32 %v287, 0.70710677
    %v296 = vmul.f32 %v288, 0.70710677
    %v297 = vmul.f32 %v289, 0.70710677
    %vm298 = vcmp.lt.f32.partialorder %v294, 0.0
    %vm299 = vcmp.lt.f32.partialorder %v295, 0.0
    %vm300 = vcmp.lt.f32.partialorder %v296, 0.0
    %vm301 = vcmp.lt.f32.partialorder %v297, 0.0
    %v302 = vsel %vm298, -1.0, 1.0
    %v303 = vsel %vm299, -1.0, 1.0
    %v304 = vsel %vm300, -1.0, 1.0
    %v305 = vsel %vm301, -1.0, 1.0
    %v306 = vand.u32 2147483647, %v294
    %v307 = vand.u32 2147483647, %v295
    %v308 = vand.u32 2147483647, %v296
    %v309 = vand.u32 2147483647, %v297
    %v310 = vmul.f32 %v306, 0.3275911
    %v311 = vmul.f32 %v307, 0.3275911
    %v312 = vmul.f32 %v308, 0.3275911
    %v313 = vmul.f32 %v309, 0.3275911
    %v314 = vadd.f32 %v310, 1.0
    %v315 = vadd.f32 %v311, 1.0
    %v316 = vadd.f32 %v312, 1.0
    %v317 = vadd.f32 %v313, 1.0
    %v318 = vrcp.pop %v314
    %v319 = vrcp.pop %v315
    %v320 = vrcp.pop %v316
    %v321 = vrcp.pop %v317
    %v322 = vmul.f32 %v318, 1.0614054
    %v323 = vmul.f32 %v319, 1.0614054
    %v324 = vmul.f32 %v320, 1.0614054
    %v325 = vmul.f32 %v321, 1.0614054
    %v326 = vadd.f32 %v322, -1.4531521
    %v327 = vadd.f32 %v323, -1.4531521
    %v328 = vadd.f32 %v324, -1.4531521
    %v329 = vadd.f32 %v325, -1.4531521
    %v330 = vmul.f32 %v326, %v318
    %v331 = vmul.f32 %v327, %v319
    %v332 = vmul.f32 %v328, %v320
    %v333 = vmul.f32 %v329, %v321
    %v334 = vadd.f32 %v330, 1.4214138
    %v335 = vadd.f32 %v331, 1.4214138
    %v336 = vadd.f32 %v332, 1.4214138
    %v337 = vadd.f32 %v333, 1.4214138
    %v338 = vmul.f32 %v334, %v318
    %v339 = vmul.f32 %v335, %v319
    %v340 = vmul.f32 %v336, %v320
    %v341 = vmul.f32 %v337, %v321
    %v342 = vadd.f32 %v338, -0.28449672
    %v343 = vadd.f32 %v339, -0.28449672
    %v344 = vadd.f32 %v340, -0.28449672
    %v345 = vadd.f32 %v341, -0.28449672
    %v346 = vmul.f32 %v342, %v318
    %v347 = vmul.f32 %v343, %v319
    %v348 = vmul.f32 %v344, %v320
    %v349 = vmul.f32 %v345, %v321
    %v350 = vadd.f32 %v346, 0.2548296
    %v351 = vadd.f32 %v347, 0.2548296
    %v352 = vadd.f32 %v348, 0.2548296
    %v353 = vadd.f32 %v349, 0.2548296
    %v354 = vmul.f32 %v350, %v318
    %v355 = vmul.f32 %v351, %v319
    %v356 = vmul.f32 %v352, %v320
    %v357 = vmul.f32 %v353, %v321
    %v358 = vsub.f32 0.0, %v306
    %v359 = vsub.f32 0.0, %v307
    %v360 = vsub.f32 0.0, %v308
    %v361 = vsub.f32 0.0, %v309
    %v362 = vmul.f32 %v358, %v306
    %v363 = vmul.f32 %v359, %v307
    %v364 = vmul.f32 %v360, %v308
    %v365 = vmul.f32 %v361, %v309
    %v366 = vmul.f32 %v362, 1.442695
    %v367 = vpow.pop %v366
    %v368 = vmul.f32 %v363, 1.442695
    %v369 = vpow.pop %v368
    %v370 = vmul.f32 %v364, 1.442695
    %v371 = vpow.pop %v370
    %v372 = vmul.f32 %v365, 1.442695
    %v373 = vpow.pop %v372
    %v374 = vmul.f32 %v354, %v367
    %v375 = vmul.f32 %v355, %v369
    %v376 = vmul.f32 %v356, %v371
    %v377 = vmul.f32 %v357, %v373
    %v378 = vsub.f32 1.0, %v374
    %v379 = vsub.f32 1.0, %v375
    %v380 = vsub.f32 1.0, %v376
    %v381 = vsub.f32 1.0, %v377
    %v382 = vmul.f32 %v302, %v378
    %v383 = vmul.f32 %v303, %v379
    %v384 = vmul.f32 %v304, %v380
    %v385 = vmul.f32 %v305, %v381
    %v386 = vadd.f32 %v382, 1.0
    %v387 = vadd.f32 %v383, 1.0
    %v388 = vadd.f32 %v384, 1.0
    %v389 = vadd.f32 %v385, 1.0
    %v390 = vmul.f32 %v290, %v386
    %v391 = vmul.f32 %v291, %v387
    %v392 = vmul.f32 %v292, %v388
    %v393 = vmul.f32 %v293, %v389
    %v394 = vpack.c.bf16 %v392, %v390
    %v395 = vpack.c.bf16 %v393, %v391
    %v396 = vld [vmem:[#allocation5] sm:$0xf]
    %v397 = vld [vmem:[#allocation5 + $0x4] sm:$0xf]
    %v398 = vld [vmem:[#allocation5 + $0x8] sm:$0xf]
    %v399 = vld [vmem:[#allocation5 + $0xc] sm:$0xf]
    %v400 = vld [vmem:[#allocation5 + $0x10] sm:$0xf]
    %v401 = vld [vmem:[#allocation5 + $0x14] sm:$0xf]
    %v402 = vld [vmem:[#allocation5 + $0x18] sm:$0xf]
    %v403 = vld [vmem:[#allocation5 + $0x1c] sm:$0xf]
    %v404 = vld [vmem:[#allocation5 + $0x20] sm:$0xf]
    %v405 = vld [vmem:[#allocation5 + $0x24] sm:$0xf]
    %v406 = vld [vmem:[#allocation5 + $0x28] sm:$0xf]
    %v407 = vld [vmem:[#allocation5 + $0x2c] sm:$0xf]
    %v408 = vld [vmem:[#allocation5 + $0x30] sm:$0xf]
    %v409 = vld [vmem:[#allocation5 + $0x34] sm:$0xf]
    %v410 = vld [vmem:[#allocation5 + $0x38] sm:$0xf]
    %v411 = vld [vmem:[#allocation5 + $0x3c] sm:$0xf]
    %v412 = vld [vmem:[#allocation5 + $0x40] sm:$0xf]
    %v413 = vld [vmem:[#allocation5 + $0x44] sm:$0xf]
    %v414 = vld [vmem:[#allocation5 + $0x48] sm:$0xf]
    %v415 = vld [vmem:[#allocation5 + $0x4c] sm:$0xf]
    %v416 = vld [vmem:[#allocation5 + $0x50] sm:$0xf]
    %v417 = vld [vmem:[#allocation5 + $0x54] sm:$0xf]
    %v418 = vld [vmem:[#allocation5 + $0x58] sm:$0xf]
    %v419 = vld [vmem:[#allocation5 + $0x5c] sm:$0xf]
    %v420 = vld [vmem:[#allocation5 + $0x60] sm:$0xf]
    %v421 = vld [vmem:[#allocation5 + $0x64] sm:$0xf]
    %v422 = vld [vmem:[#allocation5 + $0x68] sm:$0xf]
    %v423 = vld [vmem:[#allocation5 + $0x6c] sm:$0xf]
    %v424 = vld [vmem:[#allocation5 + $0x70] sm:$0xf]
    %v425 = vld [vmem:[#allocation5 + $0x74] sm:$0xf]
    %v426 = vld [vmem:[#allocation5 + $0x78] sm:$0xf]
    %v427 = vld [vmem:[#allocation5 + $0x7c] sm:$0xf]
    %v428 = vld [vmem:[%s6] sm:$0x1]
    %v430 = vlaneseq
    %v431 = vshrl.u32 %v430, 7
    %v432 = vsub.s32 0, %v431
    %v433 = vrot.slane %v428, %v432
    %v467 = vunpack.c.l.b16 %v396
    %v468 = vunpack.c.l.b16 %v397
    %v469 = vunpack.c.l.b16 %v398
    %v470 = vunpack.c.l.b16 %v399
    %v471 = vunpack.c.l.b16 %v400
    %v472 = vunpack.c.l.b16 %v401
    %v473 = vunpack.c.l.b16 %v402
    %v474 = vunpack.c.l.b16 %v403
    %v475 = vunpack.c.l.b16 %v404
    %v476 = vunpack.c.l.b16 %v405
    %v477 = vunpack.c.l.b16 %v406
    %v478 = vunpack.c.l.b16 %v407
    %v479 = vunpack.c.l.b16 %v408
    %v480 = vunpack.c.l.b16 %v409
    %v481 = vunpack.c.l.b16 %v410
    %v482 = vunpack.c.l.b16 %v411
    %v483 = vunpack.c.l.b16 %v412
    %v484 = vunpack.c.l.b16 %v413
    %v485 = vunpack.c.l.b16 %v414
    %v486 = vunpack.c.l.b16 %v415
    %v487 = vunpack.c.l.b16 %v416
    %v488 = vunpack.c.l.b16 %v417
    %v489 = vunpack.c.l.b16 %v418
    %v490 = vunpack.c.l.b16 %v419
    %v491 = vunpack.c.l.b16 %v420
    %v492 = vunpack.c.l.b16 %v421
    %v493 = vunpack.c.l.b16 %v422
    %v494 = vunpack.c.l.b16 %v423
    %v495 = vunpack.c.l.b16 %v424
    %v496 = vunpack.c.l.b16 %v425
    %v497 = vunpack.c.l.b16 %v426
    %v498 = vunpack.c.l.b16 %v427
    %v499 = vpack.c.b16 %v468, %v467
    %v500 = vpack.c.b16 %v470, %v469
    %v501 = vpack.c.b16 %v472, %v471
    %v502 = vpack.c.b16 %v474, %v473
    %v503 = vpack.c.b16 %v476, %v475
    %v504 = vpack.c.b16 %v478, %v477
    %v505 = vpack.c.b16 %v480, %v479
    %v506 = vpack.c.b16 %v482, %v481
    %v507 = vpack.c.b16 %v484, %v483
    %v508 = vpack.c.b16 %v486, %v485
    %v509 = vpack.c.b16 %v488, %v487
    %v510 = vpack.c.b16 %v490, %v489
    %v511 = vpack.c.b16 %v492, %v491
    %v512 = vpack.c.b16 %v494, %v493
    %v513 = vpack.c.b16 %v496, %v495
    %v514 = vpack.c.b16 %v498, %v497
    %531 = vmatprep.subr.bf16.mxu0 0
    %532 = vmatpush1.bf16.msra.mxu0 %v499
    %533 = vmatprep.subr.bf16.mxu0 0
    %534 = vmatpush1.bf16.msra.mxu0 %v500
    %535 = vmatprep.subr.bf16.mxu0 0
    %536 = vmatpush1.bf16.msra.mxu0 %v501
    %537 = vmatprep.subr.bf16.mxu0 0
    %538 = vmatpush1.bf16.msra.mxu0 %v502
    %539 = vmatprep.subr.bf16.mxu0 0
    %540 = vmatpush1.bf16.msra.mxu0 %v503
    %541 = vmatprep.subr.bf16.mxu0 0
    %542 = vmatpush1.bf16.msra.mxu0 %v504
    %543 = vmatprep.subr.bf16.mxu0 0
    %544 = vmatpush1.bf16.msra.mxu0 %v505
    %545 = vmatprep.subr.bf16.mxu0 0
    %546 = vmatpush1.bf16.msra.mxu0 %v506
    %547 = vmatprep.subr.bf16.mxu0 0
    %548 = vmatpush1.bf16.msra.mxu0 %v507
    %549 = vmatprep.subr.bf16.mxu0 0
    %550 = vmatpush1.bf16.msra.mxu0 %v508
    %551 = vmatprep.subr.bf16.mxu0 0
    %552 = vmatpush1.bf16.msra.mxu0 %v509
    %553 = vmatprep.subr.bf16.mxu0 0
    %554 = vmatpush1.bf16.msra.mxu0 %v510
    %555 = vmatprep.subr.bf16.mxu0 0
    %556 = vmatpush1.bf16.msra.mxu0 %v511
    %557 = vmatprep.subr.bf16.mxu0 0
    %558 = vmatpush1.bf16.msra.mxu0 %v512
    %559 = vmatprep.subr.bf16.mxu0 0
    %560 = vmatpush1.bf16.msra.mxu0 %v513
    %561 = vmatprep.subr.bf16.mxu0 0
    %562 = vmatpush1.bf16.msra.mxu0 %v514
    %563 = vmatprep.mubr.bf16.mxu0 %v395
    %564 = vmatmul.mubr.bf16.gmra.mrb[0].mxu0 %v394
    %v565 = vpop.f32.mrb[0].mxu0
    %v566 = vadd.f32 %v433, %v565
    %v567 = vpop.f32.mrb[0].mxu0
    %v568 = vpop.f32.mrb[0].mxu0
    %v569 = vadd.f32 %v433, %v568
    %v570 = vpop.f32.mrb[0].mxu0
    %571 = vdwg.mxu0
    %572 = vst [vmem:[#allocation7] sm:$0xff] %v566
    %573 = vst [vmem:[#allocation7 + $0x8] sm:$0xff] %v569
    %574 = vmax.xlane.f32.xlu0 %v566
    %v575 = vpop.xlane.xlu0 %574
    %576 = vmax.xlane.f32.xlu0 %v569
    %v577 = vpop.xlane.xlu0 %576
    %v578 = vsub.f32 %v566, %v575
    %v579 = vsub.f32 %v569, %v577
    %v580 = vmul.f32 %v578, 1.442695
    %v581 = vpow.pop %v580
    %v582 = vmul.f32 %v579, 1.442695
    %v583 = vpow.pop %v582
    %584 = vadd.xlane.f32.xlu0 %v581
    %v585 = vpop.xlane.xlu0 %584
    %586 = vadd.xlane.f32.xlu0 %v583
    %v587 = vpop.xlane.xlu0 %586
    %v588 = vlog2.pop %v585
    %v589 = vmul.f32 %v588, 0.6931472
    %v590 = vlog2.pop %v587
    %v591 = vmul.f32 %v590, 0.6931472
    %v592 = vadd.f32 %v575, %v589
    %v593 = vadd.f32 %v577, %v591
    %v594 = vlaneseq
    %v595 = vand.u32 %v594, 127
    %v596 = vld [vmem:[%s7] sm:$0xff]
    %v597 = vld [vmem:[%s7 + $0x8] sm:$0xff]
    %598 = vset.pattern.permute.xlu0 0
    %599 = vperm.xlu0 %598, %v596
    %v600 = vpop.permute.xlu0 %599
    %601 = vset.pattern.permute.xlu0 0
    %602 = vperm.xlu0 %601, %v597
    %v603 = vpop.permute.xlu0 %602
    %vm604 = vcmp.eq.s32.totalorder %v595, %v600
    %vm605 = vcmp.eq.s32.totalorder %v595, %v603
    %v606 = vsel %vm604, %v566, 0.0
    %v607 = vsel %vm605, %v569, 0.0
    %608 = vadd.xlane.f32.xlu0 %v606
    %v609 = vpop.xlane.xlu0 %608
    %610 = vadd.xlane.f32.xlu0 %v607
    %v611 = vpop.xlane.xlu0 %610
    %v612 = vsub.f32 %v592, %v609
    %v613 = vsub.f32 %v593, %v611
    %vm614 = vcmask 7168
    %615 = vst.msk [vmem:[%s9] sm:$0xff] %vm614, %v612
    %616 = vst.msk [vmem:[%s9 + $0x8] sm:$0xff] %vm614, %v613
    // Predicated region
    $region42: #{tpu_custom_call.1} parent=1 // pred_check
      _
    $region43: #{tpu_custom_call.1} parent=1 // pred_check_branch
      %618 = sbr.rel (0) target = $region45
    $region44: #{tpu_custom_call.1} parent=1 // pred_region
      %s620 = ssub.s32 256, 256
      %621 = vsyncadd [#allocation4], %s620
      %s622 = sshll.u32 [#allocation7], 4
      %s623 = int_to_ptr.vmem [resolvable:$true] %s622
      %628 = dma.vmem_to_hbm [thread:$0]  %s623, 256, %s8, [#allocation4], 128, 128, 8
    $region45: #{tpu_custom_call.1} parent=1 // pred_fallthru
      _
    // Predicated region
    $region46: #{tpu_custom_call.1} parent=1 // pred_check
      _
    $region47: #{tpu_custom_call.1} parent=1 // pred_check_branch
      %630 = sbr.rel (0) target = $region49
    $region48: #{tpu_custom_call.1} parent=1 // pred_region
      _
    $region49: #{tpu_custom_call.1} parent=1 // pred_fallthru
      _
    // Predicated region
    $region50: #{tpu_custom_call.1} parent=1 // pred_check
      _
    $region51: #{tpu_custom_call.1} parent=1 // pred_check_branch
      %632 = sbr.rel (0) target = $region53
    $region52: #{tpu_custom_call.1} parent=1 // pred_region
      %633 = dma.done [#allocation4], 256
    $region53: #{tpu_custom_call.1} parent=1 // pred_fallthru
      _
    // Predicated region
    $region54: #{tpu_custom_call.1} parent=1 // pred_check
      _
    $region55: #{tpu_custom_call.1} parent=1 // pred_check_branch
      %635 = sbr.rel (0) target = $region57
    $region56: #{tpu_custom_call.1} parent=1 // pred_region
      _
    $region57: #{tpu_custom_call.1} parent=1 // pred_fallthru
      _
    %636 = vsyncpa [#allocation3], 1
    %637 = vsyncpa [#allocation6], 1
    %638 = vsyncpa [#allocation4], 1

</llo_original>
